<compile_context>
chip_gen: v7x
topology: tpu7x:2x2x1
jax: 0.10.0
libtpu: 0.0.40
codegen_flags: <defaults>
</compile_context>

<pallas_src>
import functools

import jax
import jax.numpy as jnp
from jax.experimental import pallas as pl
from jax.experimental.pallas import tpu as pltpu

_LANE = 128


def _round_up(n, m):
    return ((n + m - 1) // m) * m


def _sublane_pack(dtype):
    """Rows per packed vreg tile for the dtype: 8 (f32), 16 (bf16), 32 (int8/fp8)."""
    return {4: 8, 2: 16, 1: 32}.get(jnp.dtype(dtype).itemsize, 8)


# --------------------------------------------------------------------------- kernel
def _mlp_kernel(num_layers, has_bias, activate_final, precision, x_ref, *refs):
    """Fused MLP over one batch tile.

    refs = (w0, [b0], w1, [b1], ..., out_ref).  Weights are whole, lane-padded
    (in, out) arrays resident in VMEM (single-buffered); x/out are pipelined
    batch tiles.  Biases are (1, out) f32 and broadcast over the batch tile.
    """
    out_ref = refs[-1]
    params = refs[:-1]
    per_layer = 2 if has_bias else 1

    h = x_ref[...]                                        # compute dtype -> MXU
    for i in range(num_layers):
        w_ref = params[per_layer * i]
        acc = jnp.dot(h, w_ref[...], preferred_element_type=jnp.float32,
                      precision=precision)
        if has_bias:
            acc = acc + params[per_layer * i + 1][...]    # f32 bias add
        if i + 1 < num_layers:
            h = acc.astype(x_ref.dtype)                   # feed next MXU pass
        else:
            h = acc                                       # keep f32 until store
    if activate_final:
        h = jnp.maximum(h, 0.0)                           # fused ReLU (free VALU slot)
    out_ref[...] = h.astype(out_ref.dtype)


# ------------------------------------------------------------------ param preparation
def prepare_mlp_params(weights, biases=None, compute_dtype=None):
    """Pad parameters to lane-dense feature dims ONCE (call at init, not per step).

    Args:
      weights: list of (D_i, D_{i+1}) matrices (already transposed vs. PyTorch).
      biases:  optional list of (D_{i+1},) vectors.
      compute_dtype: optional down-cast dtype for the MXU feed (e.g. jnp.bfloat16
        on v6e/v7x); the accumulator and bias add stay f32 either way.
    """
    has_bias = biases is not None
    num_layers = len(weights)
    dims = [int(weights[0].shape[0])] + [int(w.shape[1]) for w in weights]
    pdims = [_round_up(d, _LANE) for d in dims]
    w_dtype = jnp.dtype(compute_dtype) if compute_dtype is not None else weights[0].dtype

    pw, pb = [], []
    for i in range(num_layers):
        w = weights[i].astype(w_dtype)
        if w.shape != (pdims[i], pdims[i + 1]):
            w = (jnp.zeros((pdims[i], pdims[i + 1]), w_dtype)
                 .at[:dims[i], :dims[i + 1]].set(w))
        pw.append(w)
        if has_bias:
            b = biases[i].astype(jnp.float32)             # bias add rides f32 acc
            b = (jnp.zeros((1, pdims[i + 1]), jnp.float32)
                 .at[0, :dims[i + 1]].set(b))
            pb.append(b)

    return dict(weights=pw, biases=(pb if has_bias else None),
                dims=tuple(dims), pdims=tuple(pdims),
                compute_dtype=w_dtype)


# --------------------------------------------------------------------------- forward
def mlp_forward(x, params, *, dropout_rate=0.5, activate_final=False,
                block_batch=256, precision=None):
    """Runs the fused MLP Pallas kernel.  Dropout (eval mode) is the identity.

    On v5e, pass block_batch=128 (its 4x128x128 MXU is already filled at M=128).
    For deep/wide pure-f32 nets, pass precision=jax.lax.Precision.HIGHEST.
    """
    weights = params["weights"]
    biases = params["biases"]
    dims = params["dims"]
    pdims = params["pdims"]
    compute_dtype = params["compute_dtype"]
    has_bias = biases is not None
    num_layers = len(weights)

    B, D0 = x.shape
    assert D0 == dims[0], f"input feature dim {D0} != {dims[0]}"
    out_dim = dims[-1]
    out_dtype = x.dtype
    x = x.astype(compute_dtype)
    in_itemsize = jnp.dtype(compute_dtype).itemsize
    out_itemsize = jnp.dtype(out_dtype).itemsize

    # --- batch tiling ---------------------------------------------------------
    pack = _sublane_pack(compute_dtype)               # dtype-aware sublane packing
    if B <= block_batch:
        tb = _round_up(B, pack)
    else:
        tb = _round_up(block_batch, pack)
        if tb >= 256:                                  # v6e/v7x MXU M-fill
            tb = _round_up(tb, 256)
    # Guarantee >=2 grid steps when possible so v7x's two TensorCores both get work.
    if _round_up(B, tb) // tb == 1 and B > pack:
        tb = _round_up(-(-B // 2), pack)
    b_pad = _round_up(B, tb)
    grid = (b_pad // tb,)

    # --- pad x only when needed (avoid an extra HBM pass over activations) -----
    if b_pad != B or pdims[0] != D0:
        x_p = jnp.zeros((b_pad, pdims[0]), compute_dtype).at[:B, :D0].set(x)
    else:
        x_p = x

    # --- specs: x/out pipelined batch tiles; params whole-array, single-buffered
    args = [x_p]
    in_specs = [pl.BlockSpec((tb, pdims[0]), lambda i: (i, 0))]
    param_bytes = 0
    for li in range(num_layers):
        args.append(weights[li])
        in_specs.append(pl.BlockSpec(memory_space=pltpu.MemorySpace.VMEM))
        param_bytes += weights[li].size * jnp.dtype(weights[li].dtype).itemsize
        if has_bias:
            args.append(biases[li])
            in_specs.append(pl.BlockSpec(memory_space=pltpu.MemorySpace.VMEM))
            param_bytes += biases[li].size * jnp.dtype(biases[li].dtype).itemsize

    # --- honest VMEM budget + generation-aware limit ----------------------------
    act_bytes = 2 * tb * pdims[0] * in_itemsize + 2 * tb * pdims[-1] * out_itemsize
    interm_bytes = 2 * tb * max(pdims) * 4            # two live f32 activations
    vmem_budget = param_bytes + act_bytes + interm_bytes
    try:
        vmem_cap = int(pltpu.get_tpu_info().vmem_capacity_bytes)
    except Exception:
        vmem_cap = 64 << 20                            # conservative (v7x per-TC)
    vmem_limit = int(min(max(int(vmem_budget * 1.25) + (4 << 20), 32 << 20),
                         vmem_cap - (8 << 20)))
    # TODO(synk): if vmem_budget > vmem_cap - 8 MiB, switch to the K-tiled
    #             weight-streaming path instead of holding all weights resident.

    # --- cost estimate for the XLA scheduler ------------------------------------
    flops = 2 * B * sum(dims[i] * dims[i + 1] for i in range(num_layers))
    bytes_accessed = B * (D0 * in_itemsize + out_dim * out_itemsize) + param_bytes
    cost = pl.CostEstimate(flops=flops, transcendentals=0,
                           bytes_accessed=bytes_accessed)

    kernel = functools.partial(_mlp_kernel, num_layers, has_bias,
                               activate_final, precision)

    out_p = pl.pallas_call(
        kernel,
        out_shape=jax.ShapeDtypeStruct((b_pad, pdims[-1]), out_dtype),
        grid=grid,
        in_specs=in_specs,
        out_specs=pl.BlockSpec((tb, pdims[-1]), lambda i: (i, 0)),
        compiler_params=pltpu.CompilerParams(
            dimension_semantics=("parallel",),
            vmem_limit_bytes=vmem_limit,
        ),
        cost_estimate=cost,
    )(*args)

    # Strip batch / lane padding only when present.  Dropout (eval) == identity.
    if b_pad != B or pdims[-1] != out_dim:
        return out_p[:B, :out_dim]
    return out_p


# --------------------------------------------------------------------------- init
def init_mlp_params(key, input_size, output_sizes, has_bias=True, dtype=jnp.float32):
    """Deterministic PyTorch-style init: U(-1/sqrt(fan_in), 1/sqrt(fan_in))."""
    dims = [input_size] + list(output_sizes)
    weights, biases = [], []
    for i in range(len(dims) - 1):
        fan_in, fan_out = dims[i], dims[i + 1]
        key, wk, bk = jax.random.split(key, 3)
        bound = 1.0 / jnp.sqrt(fan_in)
        # Stored as (in, out) so the kernel does h @ W directly.
        weights.append(jax.random.uniform(wk, (fan_in, fan_out), dtype, -bound, bound))
        if has_bias:
            biases.append(jax.random.uniform(bk, (fan_out,), dtype, -bound, bound))
    return weights, (biases if has_bias else None)


if __name__ == "__main__":
    key = jax.random.PRNGKey(0)

    batch = 8
    input_size = 32
    output_sizes = (64, 32, 16)

    key, xk = jax.random.split(key)
    x = jax.random.normal(xk, (batch, input_size), jnp.float32)
    weights, biases = init_mlp_params(key, input_size, output_sizes, has_bias=True)

    # Make the f32 test values exactly bf16-representable so the MXU's bf16 input
    # rounding is exact and the check is independent of the matmul precision regime.
    bf16_exact = lambda a: a.astype(jnp.bfloat16).astype(jnp.float32)
    x = bf16_exact(x)
    weights = [bf16_exact(w) for w in weights]
    biases = [bf16_exact(b) for b in biases]

    params = prepare_mlp_params(weights, biases)      # pad once, outside the forward
    out = mlp_forward(x, params, dropout_rate=0.5, activate_final=False)
    out = jax.block_until_ready(out)

    # Reference check in plain JAX (same forward semantics: pure linear chain).
    ref = x
    for w, b in zip(weights, biases):
        ref = ref @ w + b
    assert out.shape == (batch, output_sizes[-1])
    # Tolerance covers bf16-pass rounding of intermediate activations on the MXU.
    assert jnp.allclose(out, ref, atol=5e-3, rtol=5e-3), "mismatch vs reference"

    print("KERNEL_OK")
</pallas_src>

<mosaic_0001>
module attributes {stable_mosaic.version = 11 : i64} {
  func.func @_mlp_kernel(%arg0: i32, %arg1: memref<8x128xf32, #tpu.memory_space<vmem>>, %arg2: memref<128x128xf32, #tpu.memory_space<vmem>>, %arg3: memref<1x128xf32, #tpu.memory_space<vmem>>, %arg4: memref<128x128xf32, #tpu.memory_space<vmem>>, %arg5: memref<1x128xf32, #tpu.memory_space<vmem>>, %arg6: memref<128x128xf32, #tpu.memory_space<vmem>>, %arg7: memref<1x128xf32, #tpu.memory_space<vmem>>, %arg8: memref<8x128xf32, #tpu.memory_space<vmem>>) attributes {dimension_semantics = [#tpu.dimension_semantics<parallel>], iteration_bounds = array<i64: 1>, scalar_prefetch = 0 : i64, scratch_operands = 0 : i64, tpu.core_type = #tpu.core_type<tc>, window_params = [{transform_indices = @transform_0, window_bounds = array<i64: 8, 128>}, {pipeline_mode = #tpu.pipeline_mode<synchronous>, transform_indices = @transform_1, window_bounds = array<i64: 128, 128>}, {pipeline_mode = #tpu.pipeline_mode<synchronous>, transform_indices = @transform_2, window_bounds = array<i64: 1, 128>}, {pipeline_mode = #tpu.pipeline_mode<synchronous>, transform_indices = @transform_3, window_bounds = array<i64: 128, 128>}, {pipeline_mode = #tpu.pipeline_mode<synchronous>, transform_indices = @transform_4, window_bounds = array<i64: 1, 128>}, {pipeline_mode = #tpu.pipeline_mode<synchronous>, transform_indices = @transform_5, window_bounds = array<i64: 128, 128>}, {pipeline_mode = #tpu.pipeline_mode<synchronous>, transform_indices = @transform_6, window_bounds = array<i64: 1, 128>}, {transform_indices = @transform_7, window_bounds = array<i64: 8, 128>}]} {
    %c0 = arith.constant 0 : index
    %c0_0 = arith.constant 0 : index
    %0 = vector.load %arg1[%c0, %c0_0] : memref<8x128xf32, #tpu.memory_space<vmem>>, vector<8x128xf32>
    %c0_1 = arith.constant 0 : index
    %c0_2 = arith.constant 0 : index
    %1 = vector.load %arg2[%c0_1, %c0_2] : memref<128x128xf32, #tpu.memory_space<vmem>>, vector<128x128xf32>
    %cst = arith.constant dense<0.000000e+00> : vector<8x128xf32>
    %2 = tpu.matmul %0, %1, %cst {dimension_numbers = #tpu.dot_dimension_numbers<[1], [0], [0], [1], [0, 0, 1, 1], [], []>} : vector<8x128xf32>, vector<128x128xf32>, vector<8x128xf32> -> vector<8x128xf32>
    %c0_3 = arith.constant 0 : index
    %c0_4 = arith.constant 0 : index
    %3 = vector.load %arg3[%c0_3, %c0_4] : memref<1x128xf32, #tpu.memory_space<vmem>>, vector<1x128xf32>
    %4 = vector.broadcast %3 : vector<1x128xf32> to vector<8x128xf32>
    %5 = arith.addf %2, %4 : vector<8x128xf32>
    %c0_5 = arith.constant 0 : index
    %c0_6 = arith.constant 0 : index
    %6 = vector.load %arg4[%c0_5, %c0_6] : memref<128x128xf32, #tpu.memory_space<vmem>>, vector<128x128xf32>
    %cst_7 = arith.constant dense<0.000000e+00> : vector<8x128xf32>
    %7 = tpu.matmul %5, %6, %cst_7 {dimension_numbers = #tpu.dot_dimension_numbers<[1], [0], [0], [1], [0, 0, 1, 1], [], []>} : vector<8x128xf32>, vector<128x128xf32>, vector<8x128xf32> -> vector<8x128xf32>
    %c0_8 = arith.constant 0 : index
    %c0_9 = arith.constant 0 : index
    %8 = vector.load %arg5[%c0_8, %c0_9] : memref<1x128xf32, #tpu.memory_space<vmem>>, vector<1x128xf32>
    %9 = vector.broadcast %8 : vector<1x128xf32> to vector<8x128xf32>
    %10 = arith.addf %7, %9 : vector<8x128xf32>
    %c0_10 = arith.constant 0 : index
    %c0_11 = arith.constant 0 : index
    %11 = vector.load %arg6[%c0_10, %c0_11] : memref<128x128xf32, #tpu.memory_space<vmem>>, vector<128x128xf32>
    %cst_12 = arith.constant dense<0.000000e+00> : vector<8x128xf32>
    %12 = tpu.matmul %10, %11, %cst_12 {dimension_numbers = #tpu.dot_dimension_numbers<[1], [0], [0], [1], [0, 0, 1, 1], [], []>} : vector<8x128xf32>, vector<128x128xf32>, vector<8x128xf32> -> vector<8x128xf32>
    %c0_13 = arith.constant 0 : index
    %c0_14 = arith.constant 0 : index
    %13 = vector.load %arg7[%c0_13, %c0_14] : memref<1x128xf32, #tpu.memory_space<vmem>>, vector<1x128xf32>
    %14 = vector.broadcast %13 : vector<1x128xf32> to vector<8x128xf32>
    %15 = arith.addf %12, %14 : vector<8x128xf32>
    %c0_15 = arith.constant 0 : index
    %c0_16 = arith.constant 0 : index
    %16 = vector.load %arg8[%c0_15, %c0_16] : memref<8x128xf32, #tpu.memory_space<vmem>>, vector<8x128xf32>
    tpu.vector_store %arg8[%c0_15, %c0_16], %15 {strides = array<i32>} : memref<8x128xf32, #tpu.memory_space<vmem>>, vector<8x128xf32>,
    return
  }
  func.func @transform_0(%arg0: i32) -> (i32, i32) {
    %c0_i32 = arith.constant 0 : i32
    %c0_i32_0 = arith.constant 0 : i32
    return %arg0, %c0_i32 : i32, i32
  }
  func.func @transform_1(%arg0: i32) -> (i32, i32) {
    %c0_i32 = arith.constant 0 : i32
    %c0_i32_0 = arith.constant 0 : i32
    %c0_i32_1 = arith.constant 0 : i32
    return %c0_i32, %c0_i32_0 : i32, i32
  }
  func.func @transform_2(%arg0: i32) -> (i32, i32) {
    %c0_i32 = arith.constant 0 : i32
    %c0_i32_0 = arith.constant 0 : i32
    %c0_i32_1 = arith.constant 0 : i32
    return %c0_i32, %c0_i32_0 : i32, i32
  }
  func.func @transform_3(%arg0: i32) -> (i32, i32) {
    %c0_i32 = arith.constant 0 : i32
    %c0_i32_0 = arith.constant 0 : i32
    %c0_i32_1 = arith.constant 0 : i32
    return %c0_i32, %c0_i32_0 : i32, i32
  }
  func.func @transform_4(%arg0: i32) -> (i32, i32) {
    %c0_i32 = arith.constant 0 : i32
    %c0_i32_0 = arith.constant 0 : i32
    %c0_i32_1 = arith.constant 0 : i32
    return %c0_i32, %c0_i32_0 : i32, i32
  }
  func.func @transform_5(%arg0: i32) -> (i32, i32) {
    %c0_i32 = arith.constant 0 : i32
    %c0_i32_0 = arith.constant 0 : i32
    %c0_i32_1 = arith.constant 0 : i32
    return %c0_i32, %c0_i32_0 : i32, i32
  }
  func.func @transform_6(%arg0: i32) -> (i32, i32) {
    %c0_i32 = arith.constant 0 : i32
    %c0_i32_0 = arith.constant 0 : i32
    %c0_i32_1 = arith.constant 0 : i32
    return %c0_i32, %c0_i32_0 : i32, i32
  }
  func.func @transform_7(%arg0: i32) -> (i32, i32) {
    %c0_i32 = arith.constant 0 : i32
    %c0_i32_0 = arith.constant 0 : i32
    return %arg0, %c0_i32 : i32, i32
  }
}

</mosaic_0001>

<llo_original>
// kernel: tpu_custom_call.1
$region0: #{tpu_custom_call.1}
  #allocation0 [shape = 'u32[]', space=smem, size = 0x4, offset = 0x4, fixed_abs, tag = 'smem constant byte address 0x4 - core index']
  #allocation1 [shape = 'u32[144,128]{1,0:T(1,128)}', space=vmem, size = 0x12000, scoped, tag = 'internal scratch']
  %s0 = inlined_call_operand.hbm [shape: f32[8,128], index: 0, kind: input, shape index: {}]
  %s1 = inlined_call_operand.hbm [shape: f32[128,128], index: 1, kind: input, shape index: {}]
  %s2 = inlined_call_operand.vmem [shape: f32[1,128], index: 2, kind: input, shape index: {}]
  %s3 = inlined_call_operand.hbm [shape: f32[128,128], index: 3, kind: input, shape index: {}]
  %s4 = inlined_call_operand.vmem [shape: f32[1,128], index: 4, kind: input, shape index: {}]
  %s5 = inlined_call_operand.hbm [shape: f32[128,128], index: 5, kind: input, shape index: {}]
  %s6 = inlined_call_operand.vmem [shape: f32[1,128], index: 6, kind: input, shape index: {}]
  %s7 = inlined_call_operand.hbm [shape: f32[8,128], index: 7, kind: output, shape index: {}]
  %s8 = sld [smem:[#allocation0]]
  $region54: #{tpu_custom_call.1} parent=0
    _
  %s10 = ssub.s32 1, %s8
  %s11 = scalar_select 0, %s10, %s8
  $region1: #{tpu_custom_call.1} parent=0
    #allocation2 [shape = 'u8[4096]{0}', space=vmem, size = 0x1000, scoped, tag = 'input window, operand 0, single buffered']
    #allocation3 [shape = 's32[1]{0}', space=sflag, size = 0x4, scoped, tag = 'scoped memory for tpu_custom_call.1']
    #allocation4 [shape = 's32[1]{0}', space=sflag, size = 0x4, scoped, tag = 'scoped memory for tpu_custom_call.1']
    #allocation5 [shape = 'u8[65536]{0}', space=vmem, size = 0x10000, scoped, tag = 'input window, operand 1, single buffered']
    #allocation6 [shape = 's32[1]{0}', space=sflag, size = 0x4, scoped, tag = 'scoped memory for tpu_custom_call.1']
    #allocation7 [shape = 'u8[65536]{0}', space=vmem, size = 0x10000, scoped, tag = 'input window, operand 3, single buffered']
    #allocation8 [shape = 'u8[65536]{0}', space=vmem, size = 0x10000, scoped, tag = 'input window, operand 5, single buffered']
    #allocation9 [shape = 's32[1]{0}', space=sflag, size = 0x4, scoped, tag = 'scoped memory for tpu_custom_call.1']
    #allocation10 [shape = 'u8[4096]{0}', space=vmem, size = 0x1000, scoped, tag = 'output window, operand 0, single buffered']
    %12 = vsyncpa [#allocation3], 0
    %13 = vsyncpa [#allocation6], 0
    %14 = vsyncpa [#allocation9], 0
    %15 = vsyncpa [#allocation4], 0
    // Predicated region
    $region2: #{tpu_custom_call.1} parent=1 // pred_check
      _
    $region3: #{tpu_custom_call.1} parent=1 // pred_check_branch
      %17 = sbr.rel (0) target = $region5
    $region4: #{tpu_custom_call.1} parent=1 // pred_region
      %s19 = ssub.s32 128, 128
      %20 = vsyncadd [#allocation3], %s19
      %s22 = sshll.u32 [#allocation2], 4
      %s23 = int_to_ptr.vmem [resolvable:$true] %s22
      %25 = dma.hbm_to_vmem [thread:$0]  %s0, 128, %s23, [#allocation3]
    $region5: #{tpu_custom_call.1} parent=1 // pred_fallthru
      _
    // Predicated region
    $region6: #{tpu_custom_call.1} parent=1 // pred_check
      _
    $region7: #{tpu_custom_call.1} parent=1 // pred_check_branch
      %27 = sbr.rel (0) target = $region9
    $region8: #{tpu_custom_call.1} parent=1 // pred_region
      %s29 = ssub.s32 2048, 2048
      %30 = vsyncadd [#allocation6], %s29
      %s31 = sshll.u32 [#allocation5], 4
      %s32 = int_to_ptr.vmem [resolvable:$true] %s31
      %37 = dma.hbm_to_vmem [thread:$0]  %s1, 2048, %s32, [#allocation6], 128, 128, 8
    $region9: #{tpu_custom_call.1} parent=1 // pred_fallthru
      _
    // Predicated region
    $region10: #{tpu_custom_call.1} parent=1 // pred_check
      _
    $region11: #{tpu_custom_call.1} parent=1 // pred_check_branch
      %39 = sbr.rel (0) target = $region13
    $region12: #{tpu_custom_call.1} parent=1 // pred_region
      _
    $region13: #{tpu_custom_call.1} parent=1 // pred_fallthru
      _
    // Predicated region
    $region14: #{tpu_custom_call.1} parent=1 // pred_check
      _
    $region15: #{tpu_custom_call.1} parent=1 // pred_check_branch
      %41 = sbr.rel (0) target = $region17
    $region16: #{tpu_custom_call.1} parent=1 // pred_region
      %s43 = ssub.s32 2048, 2048
      %44 = vsyncadd [#allocation6], %s43
      %s45 = sshll.u32 [#allocation7], 4
      %s46 = int_to_ptr.vmem [resolvable:$true] %s45
      %51 = dma.hbm_to_vmem [thread:$0]  %s3, 2048, %s46, [#allocation6], 128, 128, 8
    $region17: #{tpu_custom_call.1} parent=1 // pred_fallthru
      _
    // Predicated region
    $region18: #{tpu_custom_call.1} parent=1 // pred_check
      _
    $region19: #{tpu_custom_call.1} parent=1 // pred_check_branch
      %53 = sbr.rel (0) target = $region21
    $region20: #{tpu_custom_call.1} parent=1 // pred_region
      _
    $region21: #{tpu_custom_call.1} parent=1 // pred_fallthru
      _
    // Predicated region
    $region22: #{tpu_custom_call.1} parent=1 // pred_check
      _
    $region23: #{tpu_custom_call.1} parent=1 // pred_check_branch
      %55 = sbr.rel (0) target = $region25
    $region24: #{tpu_custom_call.1} parent=1 // pred_region
      %s57 = ssub.s32 2048, 2048
      %58 = vsyncadd [#allocation9], %s57
      %s59 = sshll.u32 [#allocation8], 4
      %s60 = int_to_ptr.vmem [resolvable:$true] %s59
      %65 = dma.hbm_to_vmem [thread:$0]  %s5, 2048, %s60, [#allocation9], 128, 128, 8
    $region25: #{tpu_custom_call.1} parent=1 // pred_fallthru
      _
    // Predicated region
    $region26: #{tpu_custom_call.1} parent=1 // pred_check
      _
    $region27: #{tpu_custom_call.1} parent=1 // pred_check_branch
      %67 = sbr.rel (0) target = $region29
    $region28: #{tpu_custom_call.1} parent=1 // pred_region
      _
    $region29: #{tpu_custom_call.1} parent=1 // pred_fallthru
      _
    // Predicated region
    $region30: #{tpu_custom_call.1} parent=1 // pred_check
      _
    $region31: #{tpu_custom_call.1} parent=1 // pred_check_branch
      %69 = sbr.rel (0) target = $region33
    $region32: #{tpu_custom_call.1} parent=1 // pred_region
      %70 = dma.done [#allocation3], 128
    $region33: #{tpu_custom_call.1} parent=1 // pred_fallthru
      _
    // Predicated region
    $region34: #{tpu_custom_call.1} parent=1 // pred_check
      _
    $region35: #{tpu_custom_call.1} parent=1 // pred_check_branch
      %72 = sbr.rel (0) target = $region37
    $region36: #{tpu_custom_call.1} parent=1 // pred_region
      %73 = dma.done [#allocation6], 2048
    $region37: #{tpu_custom_call.1} parent=1 // pred_fallthru
      _
    // Predicated region
    $region38: #{tpu_custom_call.1} parent=1 // pred_check
      _
    $region39: #{tpu_custom_call.1} parent=1 // pred_check_branch
      %75 = sbr.rel (0) target = $region41
    $region40: #{tpu_custom_call.1} parent=1 // pred_region
      %76 = dma.done [#allocation6], 2048
    $region41: #{tpu_custom_call.1} parent=1 // pred_fallthru
      _
    // Predicated region
    $region42: #{tpu_custom_call.1} parent=1 // pred_check
      _
    $region43: #{tpu_custom_call.1} parent=1 // pred_check_branch
      %78 = sbr.rel (0) target = $region45
    $region44: #{tpu_custom_call.1} parent=1 // pred_region
      %79 = dma.done [#allocation9], 2048
    $region45: #{tpu_custom_call.1} parent=1 // pred_fallthru
      _
    %v80 = vld [vmem:[#allocation2] sm:$0xff]
    %v81 = vld [vmem:[#allocation5] sm:$0xff]
    %v82 = vld [vmem:[#allocation5 + $0x8] sm:$0xff]
    %v83 = vld [vmem:[#allocation5 + $0x10] sm:$0xff]
    %v84 = vld [vmem:[#allocation5 + $0x18] sm:$0xff]
    %v85 = vld [vmem:[#allocation5 + $0x20] sm:$0xff]
    %v86 = vld [vmem:[#allocation5 + $0x28] sm:$0xff]
    %v87 = vld [vmem:[#allocation5 + $0x30] sm:$0xff]
    %v88 = vld [vmem:[#allocation5 + $0x38] sm:$0xff]
    %v89 = vld [vmem:[#allocation5 + $0x40] sm:$0xff]
    %v90 = vld [vmem:[#allocation5 + $0x48] sm:$0xff]
    %v91 = vld [vmem:[#allocation5 + $0x50] sm:$0xff]
    %v92 = vld [vmem:[#allocation5 + $0x58] sm:$0xff]
    %v93 = vld [vmem:[#allocation5 + $0x60] sm:$0xff]
    %v94 = vld [vmem:[#allocation5 + $0x68] sm:$0xff]
    %v95 = vld [vmem:[#allocation5 + $0x70] sm:$0xff]
    %v96 = vld [vmem:[#allocation5 + $0x78] sm:$0xff]
    %v97 = vld [vmem:[%s2] sm:$0x1]
    %v99 = vlaneseq
    %v100 = vshrl.u32 %v99, 7
    %v101 = vsub.s32 0, %v100
    %v102 = vrot.slane %v97, %v101
    %104 = vmatprep.subr.mxu0 0.0
    %105 = vmatpush1.msra.mxu0 %v81
    %106 = vmatprep.subr.mxu0 0.0
    %107 = vmatpush1.msra.mxu0 %v82
    %108 = vmatprep.subr.mxu0 0.0
    %109 = vmatpush1.msra.mxu0 %v83
    %110 = vmatprep.subr.mxu0 0.0
    %111 = vmatpush1.msra.mxu0 %v84
    %112 = vmatprep.subr.mxu0 0.0
    %113 = vmatpush1.msra.mxu0 %v85
    %114 = vmatprep.subr.mxu0 0.0
    %115 = vmatpush1.msra.mxu0 %v86
    %116 = vmatprep.subr.mxu0 0.0
    %117 = vmatpush1.msra.mxu0 %v87
    %118 = vmatprep.subr.mxu0 0.0
    %119 = vmatpush1.msra.mxu0 %v88
    %120 = vmatprep.subr.mxu0 0.0
    %121 = vmatpush1.msra.mxu0 %v89
    %122 = vmatprep.subr.mxu0 0.0
    %123 = vmatpush1.msra.mxu0 %v90
    %124 = vmatprep.subr.mxu0 0.0
    %125 = vmatpush1.msra.mxu0 %v91
    %126 = vmatprep.subr.mxu0 0.0
    %127 = vmatpush1.msra.mxu0 %v92
    %128 = vmatprep.subr.mxu0 0.0
    %129 = vmatpush1.msra.mxu0 %v93
    %130 = vmatprep.subr.mxu0 0.0
    %131 = vmatpush1.msra.mxu0 %v94
    %132 = vmatprep.subr.mxu0 0.0
    %133 = vmatpush1.msra.mxu0 %v95
    %134 = vmatprep.subr.mxu0 0.0
    %135 = vmatpush1.msra.mxu0 %v96
    %136 = vmatprep.subr.mxu0 0.0
    %137 = vmatpush1.msra.mxu0 0.0
    %138 = vmatprep.subr.mxu0 0.0
    %139 = vmatpush1.msra.mxu0 0.0
    %140 = vmatprep.subr.mxu0 0.0
    %141 = vmatpush1.msra.mxu0 0.0
    %142 = vmatprep.subr.mxu0 0.0
    %143 = vmatpush1.msra.mxu0 0.0
    %144 = vmatprep.subr.mxu0 0.0
    %145 = vmatpush1.msra.mxu0 0.0
    %146 = vmatprep.subr.mxu0 0.0
    %147 = vmatpush1.msra.mxu0 0.0
    %148 = vmatprep.subr.mxu0 0.0
    %149 = vmatpush1.msra.mxu0 0.0
    %150 = vmatprep.subr.mxu0 0.0
    %151 = vmatpush1.msra.mxu0 0.0
    %152 = vmatprep.subr.mxu0 0.0
    %153 = vmatpush1.msra.mxu0 0.0
    %154 = vmatprep.subr.mxu0 0.0
    %155 = vmatpush1.msra.mxu0 0.0
    %156 = vmatprep.subr.mxu0 0.0
    %157 = vmatpush1.msra.mxu0 0.0
    %158 = vmatprep.subr.mxu0 0.0
    %159 = vmatpush1.msra.mxu0 0.0
    %160 = vmatprep.subr.mxu0 0.0
    %161 = vmatpush1.msra.mxu0 0.0
    %162 = vmatprep.subr.mxu0 0.0
    %163 = vmatpush1.msra.mxu0 0.0
    %164 = vmatprep.subr.mxu0 0.0
    %165 = vmatpush1.msra.mxu0 0.0
    %166 = vmatprep.subr.mxu0 0.0
    %167 = vmatpush1.msra.mxu0 0.0
    %168 = vmatprep.mubr.f32.mxu0 0.0
    %169 = vmatmul.mubr.f32.gmra.mrb[0].mxu0 %v80
    %v170 = vpop.f32.mrb[0].mxu0
    %v171 = vadd.f32 %v102, %v170
    %v172 = vpop.f32.mrb[0].mxu0
    %173 = vdwg.mxu0
    %v174 = vld [vmem:[#allocation7] sm:$0xff]
    %v175 = vld [vmem:[#allocation7 + $0x8] sm:$0xff]
    %v176 = vld [vmem:[#allocation7 + $0x10] sm:$0xff]
    %v177 = vld [vmem:[#allocation7 + $0x18] sm:$0xff]
    %v178 = vld [vmem:[#allocation7 + $0x20] sm:$0xff]
    %v179 = vld [vmem:[#allocation7 + $0x28] sm:$0xff]
    %v180 = vld [vmem:[#allocation7 + $0x30] sm:$0xff]
    %v181 = vld [vmem:[#allocation7 + $0x38] sm:$0xff]
    %v182 = vld [vmem:[#allocation7 + $0x40] sm:$0xff]
    %v183 = vld [vmem:[#allocation7 + $0x48] sm:$0xff]
    %v184 = vld [vmem:[#allocation7 + $0x50] sm:$0xff]
    %v185 = vld [vmem:[#allocation7 + $0x58] sm:$0xff]
    %v186 = vld [vmem:[#allocation7 + $0x60] sm:$0xff]
    %v187 = vld [vmem:[#allocation7 + $0x68] sm:$0xff]
    %v188 = vld [vmem:[#allocation7 + $0x70] sm:$0xff]
    %v189 = vld [vmem:[#allocation7 + $0x78] sm:$0xff]
    %v190 = vld [vmem:[%s4] sm:$0x1]
    %v192 = vlaneseq
    %v193 = vshrl.u32 %v192, 7
    %v194 = vsub.s32 0, %v193
    %v195 = vrot.slane %v190, %v194
    %197 = vmatprep.subr.mxu0 0.0
    %198 = vmatpush1.msra.mxu0 %v174
    %199 = vmatprep.subr.mxu0 0.0
    %200 = vmatpush1.msra.mxu0 %v175
    %201 = vmatprep.subr.mxu0 0.0
    %202 = vmatpush1.msra.mxu0 %v176
    %203 = vmatprep.subr.mxu0 0.0
    %204 = vmatpush1.msra.mxu0 %v177
    %205 = vmatprep.subr.mxu0 0.0
    %206 = vmatpush1.msra.mxu0 %v178
    %207 = vmatprep.subr.mxu0 0.0
    %208 = vmatpush1.msra.mxu0 %v179
    %209 = vmatprep.subr.mxu0 0.0
    %210 = vmatpush1.msra.mxu0 %v180
    %211 = vmatprep.subr.mxu0 0.0
    %212 = vmatpush1.msra.mxu0 %v181
    %213 = vmatprep.subr.mxu0 0.0
    %214 = vmatpush1.msra.mxu0 %v182
    %215 = vmatprep.subr.mxu0 0.0
    %216 = vmatpush1.msra.mxu0 %v183
    %217 = vmatprep.subr.mxu0 0.0
    %218 = vmatpush1.msra.mxu0 %v184
    %219 = vmatprep.subr.mxu0 0.0
    %220 = vmatpush1.msra.mxu0 %v185
    %221 = vmatprep.subr.mxu0 0.0
    %222 = vmatpush1.msra.mxu0 %v186
    %223 = vmatprep.subr.mxu0 0.0
    %224 = vmatpush1.msra.mxu0 %v187
    %225 = vmatprep.subr.mxu0 0.0
    %226 = vmatpush1.msra.mxu0 %v188
    %227 = vmatprep.subr.mxu0 0.0
    %228 = vmatpush1.msra.mxu0 %v189
    %229 = vmatprep.subr.mxu0 0.0
    %230 = vmatpush1.msra.mxu0 0.0
    %231 = vmatprep.subr.mxu0 0.0
    %232 = vmatpush1.msra.mxu0 0.0
    %233 = vmatprep.subr.mxu0 0.0
    %234 = vmatpush1.msra.mxu0 0.0
    %235 = vmatprep.subr.mxu0 0.0
    %236 = vmatpush1.msra.mxu0 0.0
    %237 = vmatprep.subr.mxu0 0.0
    %238 = vmatpush1.msra.mxu0 0.0
    %239 = vmatprep.subr.mxu0 0.0
    %240 = vmatpush1.msra.mxu0 0.0
    %241 = vmatprep.subr.mxu0 0.0
    %242 = vmatpush1.msra.mxu0 0.0
    %243 = vmatprep.subr.mxu0 0.0
    %244 = vmatpush1.msra.mxu0 0.0
    %245 = vmatprep.subr.mxu0 0.0
    %246 = vmatpush1.msra.mxu0 0.0
    %247 = vmatprep.subr.mxu0 0.0
    %248 = vmatpush1.msra.mxu0 0.0
    %249 = vmatprep.subr.mxu0 0.0
    %250 = vmatpush1.msra.mxu0 0.0
    %251 = vmatprep.subr.mxu0 0.0
    %252 = vmatpush1.msra.mxu0 0.0
    %253 = vmatprep.subr.mxu0 0.0
    %254 = vmatpush1.msra.mxu0 0.0
    %255 = vmatprep.subr.mxu0 0.0
    %256 = vmatpush1.msra.mxu0 0.0
    %257 = vmatprep.subr.mxu0 0.0
    %258 = vmatpush1.msra.mxu0 0.0
    %259 = vmatprep.subr.mxu0 0.0
    %260 = vmatpush1.msra.mxu0 0.0
    %261 = vmatprep.mubr.f32.mxu0 0.0
    %262 = vmatmul.mubr.f32.gmra.mrb[0].mxu0 %v171
    %v263 = vpop.f32.mrb[0].mxu0
    %v264 = vadd.f32 %v195, %v263
    %v265 = vpop.f32.mrb[0].mxu0
    %266 = vdwg.mxu0
    %v267 = vld [vmem:[#allocation8] sm:$0xff]
    %v268 = vld [vmem:[#allocation8 + $0x8] sm:$0xff]
    %v269 = vld [vmem:[#allocation8 + $0x10] sm:$0xff]
    %v270 = vld [vmem:[#allocation8 + $0x18] sm:$0xff]
    %v271 = vld [vmem:[#allocation8 + $0x20] sm:$0xff]
    %v272 = vld [vmem:[#allocation8 + $0x28] sm:$0xff]
    %v273 = vld [vmem:[#allocation8 + $0x30] sm:$0xff]
    %v274 = vld [vmem:[#allocation8 + $0x38] sm:$0xff]
    %v275 = vld [vmem:[#allocation8 + $0x40] sm:$0xff]
    %v276 = vld [vmem:[#allocation8 + $0x48] sm:$0xff]
    %v277 = vld [vmem:[#allocation8 + $0x50] sm:$0xff]
    %v278 = vld [vmem:[#allocation8 + $0x58] sm:$0xff]
    %v279 = vld [vmem:[#allocation8 + $0x60] sm:$0xff]
    %v280 = vld [vmem:[#allocation8 + $0x68] sm:$0xff]
    %v281 = vld [vmem:[#allocation8 + $0x70] sm:$0xff]
    %v282 = vld [vmem:[#allocation8 + $0x78] sm:$0xff]
    %v283 = vld [vmem:[%s6] sm:$0x1]
    %v285 = vlaneseq
    %v286 = vshrl.u32 %v285, 7
    %v287 = vsub.s32 0, %v286
    %v288 = vrot.slane %v283, %v287
    %290 = vmatprep.subr.mxu0 0.0
    %291 = vmatpush1.msra.mxu0 %v267
    %292 = vmatprep.subr.mxu0 0.0
    %293 = vmatpush1.msra.mxu0 %v268
    %294 = vmatprep.subr.mxu0 0.0
    %295 = vmatpush1.msra.mxu0 %v269
    %296 = vmatprep.subr.mxu0 0.0
    %297 = vmatpush1.msra.mxu0 %v270
    %298 = vmatprep.subr.mxu0 0.0
    %299 = vmatpush1.msra.mxu0 %v271
    %300 = vmatprep.subr.mxu0 0.0
    %301 = vmatpush1.msra.mxu0 %v272
    %302 = vmatprep.subr.mxu0 0.0
    %303 = vmatpush1.msra.mxu0 %v273
    %304 = vmatprep.subr.mxu0 0.0
    %305 = vmatpush1.msra.mxu0 %v274
    %306 = vmatprep.subr.mxu0 0.0
    %307 = vmatpush1.msra.mxu0 %v275
    %308 = vmatprep.subr.mxu0 0.0
    %309 = vmatpush1.msra.mxu0 %v276
    %310 = vmatprep.subr.mxu0 0.0
    %311 = vmatpush1.msra.mxu0 %v277
    %312 = vmatprep.subr.mxu0 0.0
    %313 = vmatpush1.msra.mxu0 %v278
    %314 = vmatprep.subr.mxu0 0.0
    %315 = vmatpush1.msra.mxu0 %v279
    %316 = vmatprep.subr.mxu0 0.0
    %317 = vmatpush1.msra.mxu0 %v280
    %318 = vmatprep.subr.mxu0 0.0
    %319 = vmatpush1.msra.mxu0 %v281
    %320 = vmatprep.subr.mxu0 0.0
    %321 = vmatpush1.msra.mxu0 %v282
    %322 = vmatprep.subr.mxu0 0.0
    %323 = vmatpush1.msra.mxu0 0.0
    %324 = vmatprep.subr.mxu0 0.0
    %325 = vmatpush1.msra.mxu0 0.0
    %326 = vmatprep.subr.mxu0 0.0
    %327 = vmatpush1.msra.mxu0 0.0
    %328 = vmatprep.subr.mxu0 0.0
    %329 = vmatpush1.msra.mxu0 0.0
    %330 = vmatprep.subr.mxu0 0.0
    %331 = vmatpush1.msra.mxu0 0.0
    %332 = vmatprep.subr.mxu0 0.0
    %333 = vmatpush1.msra.mxu0 0.0
    %334 = vmatprep.subr.mxu0 0.0
    %335 = vmatpush1.msra.mxu0 0.0
    %336 = vmatprep.subr.mxu0 0.0
    %337 = vmatpush1.msra.mxu0 0.0
    %338 = vmatprep.subr.mxu0 0.0
    %339 = vmatpush1.msra.mxu0 0.0
    %340 = vmatprep.subr.mxu0 0.0
    %341 = vmatpush1.msra.mxu0 0.0
    %342 = vmatprep.subr.mxu0 0.0
    %343 = vmatpush1.msra.mxu0 0.0
    %344 = vmatprep.subr.mxu0 0.0
    %345 = vmatpush1.msra.mxu0 0.0
    %346 = vmatprep.subr.mxu0 0.0
    %347 = vmatpush1.msra.mxu0 0.0
    %348 = vmatprep.subr.mxu0 0.0
    %349 = vmatpush1.msra.mxu0 0.0
    %350 = vmatprep.subr.mxu0 0.0
    %351 = vmatpush1.msra.mxu0 0.0
    %352 = vmatprep.subr.mxu0 0.0
    %353 = vmatpush1.msra.mxu0 0.0
    %354 = vmatprep.mubr.f32.mxu0 0.0
    %355 = vmatmul.mubr.f32.gmra.mrb[0].mxu0 %v264
    %v356 = vpop.f32.mrb[0].mxu0
    %v357 = vadd.f32 %v288, %v356
    %v358 = vpop.f32.mrb[0].mxu0
    %359 = vdwg.mxu0
    %360 = vst [vmem:[#allocation10] sm:$0xff] %v357
    // Predicated region
    $region46: #{tpu_custom_call.1} parent=1 // pred_check
      _
    $region47: #{tpu_custom_call.1} parent=1 // pred_check_branch
      %362 = sbr.rel (0) target = $region49
    $region48: #{tpu_custom_call.1} parent=1 // pred_region
      %s364 = ssub.s32 128, 128
      %365 = vsyncadd [#allocation4], %s364
      %s367 = sshll.u32 [#allocation10], 4
      %s368 = int_to_ptr.vmem [resolvable:$true] %s367
      %370 = dma.vmem_to_hbm [thread:$0]  %s368, 128, %s7, [#allocation4]
    $region49: #{tpu_custom_call.1} parent=1 // pred_fallthru
      _
    // Predicated region
    $region50: #{tpu_custom_call.1} parent=1 // pred_check
      _
    $region51: #{tpu_custom_call.1} parent=1 // pred_check_branch
      %372 = sbr.rel (0) target = $region53
    $region52: #{tpu_custom_call.1} parent=1 // pred_region
      %373 = dma.done [#allocation4], 128
    $region53: #{tpu_custom_call.1} parent=1 // pred_fallthru
      _
    %374 = vsyncpa [#allocation3], 1
    %375 = vsyncpa [#allocation6], 1
    %376 = vsyncpa [#allocation9], 1
    %377 = vsyncpa [#allocation4], 1

</llo_original>
